<compile_context>
chip_gen: v7x
topology: tpu7x:2x2x1
jax: 0.10.0
libtpu: 0.0.40
codegen_flags: <defaults>
</compile_context>

<pallas_src>
import jax
import jax.numpy as jnp
from jax.experimental import pallas as pl
from jax.experimental.pallas import tpu as pltpu

LEAKY_SLOPE = 0.01  # nn.LeakyReLU() default


def _round_up(x, m):
    return ((x + m - 1) // m) * m


def _cdiv(a, b):
    return -(-a // b)


def _leaky_relu(x):
    return jnp.where(x > 0, x, LEAKY_SLOPE * x)


# ----------------------------------------------------------------------------- kernel
def _make_kernel(F, OUT_W, num_actions):
    def kernel(state_ref, w_in_ref, w_hid_ref, w_head_ref, b_ref, out_ref):
        # state.float() in the reference; cast straight to bf16 for the MXU (weights are bf16).
        x = state_ref[...].astype(jnp.bfloat16)

        def layer(h_bf16, w, b):
            # bf16 operands on the MXU, f32 accumulation + f32 leaky-ReLU epilogue,
            # bf16 activation handed to the next matmul (halves VMEM temp traffic).
            y = jnp.dot(h_bf16, w, preferred_element_type=jnp.float32) + b
            return _leaky_relu(y).astype(jnp.bfloat16)

        # Fused critic||actor hidden stack (block-diagonal weights).
        h = layer(x, w_in_ref[...], b_ref[0:1, :F])
        h = layer(h, w_hid_ref[0], b_ref[1:2, :F])
        h = layer(h, w_hid_ref[1], b_ref[2:3, :F])

        # Fused head: lane 0 = critic value, lanes 1..num_actions = actor logits.
        out = (jnp.dot(h, w_head_ref[...], preferred_element_type=jnp.float32)
               + b_ref[3:4, :OUT_W])

        lane = jax.lax.broadcasted_iota(jnp.int32, out.shape, 1)
        policy_mask = (lane >= 1) & (lane <= num_actions)

        # Numerically-stable softmax restricted to the logit lanes.
        masked = jnp.where(policy_mask, out, -jnp.inf)
        m = jnp.max(masked, axis=-1, keepdims=True)
        e = jnp.exp(masked - m)                       # exactly 0 on masked lanes
        denom = jnp.sum(e, axis=-1, keepdims=True)
        probs = e * pl.reciprocal(denom, approx=True)

        # Fused merge: one select instead of select+add; bf16 store halves HBM writeback.
        out_ref[...] = jnp.where(lane == 0, out, probs).astype(out_ref.dtype)

    return kernel


# ----------------------------------------------------------------------------- tiling
def _choose_tile_b(B, *, tile_b_max=2048):
    """Balanced batch tile: large tiles (step-overhead amortization), >=2 grid steps for
    non-tiny batches (v7x megacore), padding waste capped at < one tile."""
    B = max(int(B), 1)
    if B >= 8 * 4096:
        tile_b_max = 4096  # huge batches: amortize the ~0.35us/step overhead further
    n_tiles = _cdiv(B, tile_b_max)
    if n_tiles < 2 and B > 64:
        n_tiles = 2        # keep both v7x TensorCores busy (no-op on single-TC v5e/v6e)
    # 16-row granularity: bf16 output sublane packing; also satisfies f32 (8,128) tiling.
    return _round_up(_cdiv(B, n_tiles), 16)


# ----------------------------------------------------------------------------- wrapper
def actor_critic_forward(state, fused, meta, *, tile_b=None):
    """state: [B, num_inputs]. Returns (value [B,1], policy [B,num_actions]) in f32."""
    w_in, w_hid, w_head, biases = fused
    F, OUT_W, BMAX, num_actions = meta["F"], meta["OUT_W"], meta["BMAX"], meta["num_actions"]
    B, num_inputs = state.shape

    if tile_b is None:
        tile_b = _choose_tile_b(B)
    else:
        tile_b = _round_up(min(int(tile_b), _round_up(B, 16)), 16)

    b_pad = _round_up(B, tile_b)
    if b_pad != B:
        state = jnp.pad(state, ((0, b_pad - B), (0, 0)))
    grid = (b_pad // tile_b,)

    # VMEM budget from actual buffer sizes:
    #   resident bf16 weights (single-buffered) + f32 biases
    #   + double-buffered f32 state tile and bf16 out tile
    #   + headroom for the in-kernel f32/bf16 temporaries, clamped to the v7x scoped budget.
    w_bytes = (w_in.size + w_hid.size + w_head.size) * 2 + biases.size * 4
    io_bytes = 2 * tile_b * num_inputs * 4 + 2 * tile_b * OUT_W * 2
    tmp_bytes = 6 * tile_b * max(F, OUT_W) * 4
    vmem_limit = int(min(40 * 2**20,
                         max(4 * 2**20, w_bytes + io_bytes + tmp_bytes + (2 << 20))))

    kernel = _make_kernel(F, OUT_W, num_actions)
    resident = pl.Buffered(1)   # constant index_map -> no useless second pipeline buffer

    out = pl.pallas_call(
        kernel,
        out_shape=jax.ShapeDtypeStruct((b_pad, OUT_W), jnp.bfloat16),
        grid_spec=pltpu.PrefetchScalarGridSpec(
            num_scalar_prefetch=0,
            grid=grid,
            in_specs=[
                pl.BlockSpec((tile_b, num_inputs), lambda i: (i, 0)),     # state tile
                pl.BlockSpec((num_inputs, F), lambda i: (0, 0), pipeline_mode=resident),
                pl.BlockSpec((2, F, F), lambda i: (0, 0, 0), pipeline_mode=resident),
                pl.BlockSpec((F, OUT_W), lambda i: (0, 0), pipeline_mode=resident),
                pl.BlockSpec((4, BMAX), lambda i: (0, 0), pipeline_mode=resident),
            ],
            out_specs=pl.BlockSpec((tile_b, OUT_W), lambda i: (i, 0)),
        ),
        compiler_params=pltpu.CompilerParams(
            dimension_semantics=("parallel",),
            vmem_limit_bytes=vmem_limit,
        ),
    )(state, w_in, w_hid, w_head, biases)

    # Slice the padded lane-dense slab ONCE, then split the tiny result.
    out_small = out[:B, :1 + num_actions].astype(jnp.float32)
    value = out_small[:, 0:1]
    policy = out_small[:, 1:]
    return value, policy


# ----------------------------------------------------------------------------- params
def _init_linear(key, fan_in, fan_out):
    """PyTorch-style Linear init U(-1/sqrt(fan_in), 1/sqrt(fan_in)).
    Weight is [fan_in, fan_out] (torch weight.T), bias [1, fan_out]."""
    kw, kb = jax.random.split(key)
    bound = 1.0 / jnp.sqrt(jnp.asarray(fan_in, jnp.float32))
    w = jax.random.uniform(kw, (fan_in, fan_out), jnp.float32, -bound, bound)
    b = jax.random.uniform(kb, (1, fan_out), jnp.float32, -bound, bound)
    return w, b


def build_params(key, num_inputs, num_actions, l1, l2, l3):
    keys = jax.random.split(key, 8)
    cw1, cb1 = _init_linear(keys[0], num_inputs, l1)
    cw2, cb2 = _init_linear(keys[1], l1, l2)
    cw3, cb3 = _init_linear(keys[2], l2, l3)
    cw4, cb4 = _init_linear(keys[3], l3, 1)
    aw1, ab1 = _init_linear(keys[4], num_inputs, l1)
    aw2, ab2 = _init_linear(keys[5], l1, l2)
    aw3, ab3 = _init_linear(keys[6], l2, l3)
    aw4, ab4 = _init_linear(keys[7], l3, num_actions)
    critic = (cw1, cb1, cw2, cb2, cw3, cb3, cw4, cb4)
    actor = (aw1, ab1, aw2, ab2, aw3, ab3, aw4, ab4)
    return critic, actor


def fuse_params(critic, actor, num_actions):
    """Fuse critic+actor into block-diagonal bf16 weight slabs + one f32 bias slab."""
    cw1, cb1, cw2, cb2, cw3, cb3, cw4, cb4 = critic
    aw1, ab1, aw2, ab2, aw3, ab3, aw4, ab4 = actor
    num_inputs = cw1.shape[0]
    l1, l2, l3 = cw1.shape[1], cw2.shape[1], cw3.shape[1]

    H = _round_up(max(l1, l2, l3), 64)        # per-network padded hidden width
    F = 2 * H                                 # fused width, multiple of 128
    OUT_W = _round_up(1 + num_actions, 128)   # lane-dense head width
    BMAX = max(F, OUT_W)

    # Layer 1: concat along output axis.
    w_in = jnp.zeros((num_inputs, F), jnp.float32)
    w_in = w_in.at[:, :l1].set(cw1).at[:, H:H + l1].set(aw1)
    b1 = (jnp.zeros((F,), jnp.float32)
          .at[:l1].set(cb1.reshape(-1)).at[H:H + l1].set(ab1.reshape(-1)))

    # Layers 2/3: block-diagonal.
    def blockdiag(cw, aw, li, lo):
        w = jnp.zeros((F, F), jnp.float32)
        return w.at[:li, :lo].set(cw).at[H:H + li, H:H + lo].set(aw)

    w2 = blockdiag(cw2, aw2, l1, l2)
    w3 = blockdiag(cw3, aw3, l2, l3)
    b2 = (jnp.zeros((F,), jnp.float32)
          .at[:l2].set(cb2.reshape(-1)).at[H:H + l2].set(ab2.reshape(-1)))
    b3 = (jnp.zeros((F,), jnp.float32)
          .at[:l3].set(cb3.reshape(-1)).at[H:H + l3].set(ab3.reshape(-1)))

    # Head: critic rows -> lane 0 (value), actor rows -> lanes 1..num_actions (logits).
    w_head = jnp.zeros((F, OUT_W), jnp.float32)
    w_head = w_head.at[:l3, 0:1].set(cw4).at[H:H + l3, 1:1 + num_actions].set(aw4)
    b_head = (jnp.zeros((OUT_W,), jnp.float32)
              .at[0].set(cb4.reshape(-1)[0])
              .at[1:1 + num_actions].set(ab4.reshape(-1)))

    biases = (jnp.zeros((4, BMAX), jnp.float32)
              .at[0, :F].set(b1).at[1, :F].set(b2).at[2, :F].set(b3).at[3, :OUT_W].set(b_head))

    fused = (w_in.astype(jnp.bfloat16),
             jnp.stack([w2, w3], axis=0).astype(jnp.bfloat16),
             w_head.astype(jnp.bfloat16),
             biases)
    meta = dict(F=F, OUT_W=OUT_W, BMAX=BMAX, num_actions=num_actions)
    return fused, meta


# ----------------------------------------------------------------------------- reference
def actor_critic_reference(state, critic, actor):
    def mlp(x, params, softmax):
        w1, b1, w2, b2, w3, b3, w4, b4 = params
        h = _leaky_relu(x @ w1 + b1)
        h = _leaky_relu(h @ w2 + b2)
        h = _leaky_relu(h @ w3 + b3)
        y = h @ w4 + b4
        return jax.nn.softmax(y, axis=-1) if softmax else y

    x = state.astype(jnp.float32)
    return mlp(x, critic, False), mlp(x, actor, True)


# ----------------------------------------------------------------------------- main
if __name__ == "__main__":
    key = jax.random.PRNGKey(0)
    k_state, k_state2, k_params = jax.random.split(key, 3)

    # Small shapes consistent with the module's forward.
    batch = 2
    num_inputs = 8       # len(env.reset())
    num_actions = 4
    first, second, third = 32, 32, 32

    critic_params, actor_params = build_params(
        k_params, num_inputs, num_actions, first, second, third
    )
    fused, meta = fuse_params(critic_params, actor_params, num_actions)

    # --- small batch (single tile, grid=(1,)) ---
    state = jax.random.normal(k_state, (batch, num_inputs), jnp.float32)
    value, policy = actor_critic_forward(state, fused, meta)
    jax.block_until_ready((value, policy))

    assert value.shape == (batch, 1)
    assert policy.shape == (batch, num_actions)
    # Softmax rows must sum to 1 (approx reciprocal + bf16 output -> loose tolerance).
    assert jnp.allclose(jnp.sum(policy, axis=-1), 1.0, atol=2e-2)

    value_ref, policy_ref = actor_critic_reference(state, critic_params, actor_params)
    assert jnp.allclose(value, value_ref, atol=5e-2, rtol=5e-2)
    assert jnp.allclose(policy, policy_ref, atol=5e-2, rtol=5e-2)

    # --- larger batch (exercises balanced tiling, >=2 parallel grid steps, padding) ---
    batch2 = 300
    state2 = jax.random.normal(k_state2, (batch2, num_inputs), jnp.float32)
    value2, policy2 = actor_critic_forward(state2, fused, meta)
    jax.block_until_ready((value2, policy2))

    assert value2.shape == (batch2, 1)
    assert policy2.shape == (batch2, num_actions)
    assert jnp.allclose(jnp.sum(policy2, axis=-1), 1.0, atol=2e-2)
    value2_ref, policy2_ref = actor_critic_reference(state2, critic_params, actor_params)
    assert jnp.allclose(value2, value2_ref, atol=5e-2, rtol=5e-2)
    assert jnp.allclose(policy2, policy2_ref, atol=5e-2, rtol=5e-2)

    print("KERNEL_OK")
</pallas_src>

<mosaic_0001>
module attributes {stable_mosaic.version = 11 : i64} {
  func.func @kernel(%arg0: i32, %arg1: memref<16x8xf32, #tpu.memory_space<vmem>>, %arg2: memref<8x128xbf16, #tpu.memory_space<vmem>>, %arg3: memref<2x128x128xbf16, #tpu.memory_space<vmem>>, %arg4: memref<128x128xbf16, #tpu.memory_space<vmem>>, %arg5: memref<4x128xf32, #tpu.memory_space<vmem>>, %arg6: memref<16x128xbf16, #tpu.memory_space<vmem>>) attributes {dimension_semantics = [#tpu.dimension_semantics<parallel>], iteration_bounds = array<i64: 1>, scalar_prefetch = 0 : i64, scratch_operands = 0 : i64, tpu.core_type = #tpu.core_type<tc>, window_params = [{transform_indices = @transform_0, window_bounds = array<i64: 16, 8>}, {pipeline_mode = #tpu.pipeline_mode<synchronous>, transform_indices = @transform_1, window_bounds = array<i64: 8, 128>}, {pipeline_mode = #tpu.pipeline_mode<synchronous>, transform_indices = @transform_2, window_bounds = array<i64: 2, 128, 128>}, {pipeline_mode = #tpu.pipeline_mode<synchronous>, transform_indices = @transform_3, window_bounds = array<i64: 128, 128>}, {pipeline_mode = #tpu.pipeline_mode<synchronous>, transform_indices = @transform_4, window_bounds = array<i64: 4, 128>}, {transform_indices = @transform_5, window_bounds = array<i64: 16, 128>}]} {
    %c0 = arith.constant 0 : index
    %c0_0 = arith.constant 0 : index
    %0 = vector.load %arg1[%c0, %c0_0] : memref<16x8xf32, #tpu.memory_space<vmem>>, vector<16x8xf32>
    %1 = arith.truncf %0 : vector<16x8xf32> to vector<16x8xbf16>
    %c0_1 = arith.constant 0 : index
    %c0_2 = arith.constant 0 : index
    %2 = vector.load %arg2[%c0_1, %c0_2] : memref<8x128xbf16, #tpu.memory_space<vmem>>, vector<8x128xbf16>
    %c0_3 = arith.constant 0 : index
    %c0_4 = arith.constant 0 : index
    %3 = vector.load %arg5[%c0_3, %c0_4] : memref<4x128xf32, #tpu.memory_space<vmem>>, vector<1x128xf32>
    %cst = arith.constant dense<0.000000e+00> : vector<16x128xf32>
    %4 = tpu.matmul %1, %2, %cst {dimension_numbers = #tpu.dot_dimension_numbers<[1], [0], [0], [1], [0, 0, 1, 1], [], []>} : vector<16x8xbf16>, vector<8x128xbf16>, vector<16x128xf32> -> vector<16x128xf32>
    %5 = vector.broadcast %3 : vector<1x128xf32> to vector<16x128xf32>
    %6 = arith.addf %4, %5 : vector<16x128xf32>
    %cst_5 = arith.constant 0.000000e+00 : f32
    %7 = vector.broadcast %cst_5 : f32 to vector<16x128xf32>
    %8 = arith.cmpf ogt, %6, %7 : vector<16x128xf32>
    %cst_6 = arith.constant 0.00999999977 : f32
    %9 = vector.broadcast %cst_6 : f32 to vector<16x128xf32>
    %10 = arith.mulf %9, %6 : vector<16x128xf32>
    %11 = arith.select %8, %6, %10 : vector<16x128xi1>, vector<16x128xf32>
    %12 = arith.truncf %11 : vector<16x128xf32> to vector<16x128xbf16>
    %c0_7 = arith.constant 0 : index
    %c0_8 = arith.constant 0 : index
    %c0_9 = arith.constant 0 : index
    %13 = vector.load %arg3[%c0_7, %c0_8, %c0_9] : memref<2x128x128xbf16, #tpu.memory_space<vmem>>, vector<1x128x128xbf16>
    %14 = vector.shape_cast %13 : vector<1x128x128xbf16> to vector<128x128xbf16>
    %c1 = arith.constant 1 : index
    %c0_10 = arith.constant 0 : index
    %15 = vector.load %arg5[%c1, %c0_10] : memref<4x128xf32, #tpu.memory_space<vmem>>, vector<1x128xf32>
    %cst_11 = arith.constant dense<0.000000e+00> : vector<16x128xf32>
    %16 = tpu.matmul %12, %14, %cst_11 {dimension_numbers = #tpu.dot_dimension_numbers<[1], [0], [0], [1], [0, 0, 1, 1], [], []>} : vector<16x128xbf16>, vector<128x128xbf16>, vector<16x128xf32> -> vector<16x128xf32>
    %17 = vector.broadcast %15 : vector<1x128xf32> to vector<16x128xf32>
    %18 = arith.addf %16, %17 : vector<16x128xf32>
    %cst_12 = arith.constant 0.000000e+00 : f32
    %19 = vector.broadcast %cst_12 : f32 to vector<16x128xf32>
    %20 = arith.cmpf ogt, %18, %19 : vector<16x128xf32>
    %cst_13 = arith.constant 0.00999999977 : f32
    %21 = vector.broadcast %cst_13 : f32 to vector<16x128xf32>
    %22 = arith.mulf %21, %18 : vector<16x128xf32>
    %23 = arith.select %20, %18, %22 : vector<16x128xi1>, vector<16x128xf32>
    %24 = arith.truncf %23 : vector<16x128xf32> to vector<16x128xbf16>
    %c1_14 = arith.constant 1 : index
    %c0_15 = arith.constant 0 : index
    %c0_16 = arith.constant 0 : index
    %25 = vector.load %arg3[%c1_14, %c0_15, %c0_16] : memref<2x128x128xbf16, #tpu.memory_space<vmem>>, vector<1x128x128xbf16>
    %26 = vector.shape_cast %25 : vector<1x128x128xbf16> to vector<128x128xbf16>
    %c2 = arith.constant 2 : index
    %c0_17 = arith.constant 0 : index
    %27 = vector.load %arg5[%c2, %c0_17] : memref<4x128xf32, #tpu.memory_space<vmem>>, vector<1x128xf32>
    %cst_18 = arith.constant dense<0.000000e+00> : vector<16x128xf32>
    %28 = tpu.matmul %24, %26, %cst_18 {dimension_numbers = #tpu.dot_dimension_numbers<[1], [0], [0], [1], [0, 0, 1, 1], [], []>} : vector<16x128xbf16>, vector<128x128xbf16>, vector<16x128xf32> -> vector<16x128xf32>
    %29 = vector.broadcast %27 : vector<1x128xf32> to vector<16x128xf32>
    %30 = arith.addf %28, %29 : vector<16x128xf32>
    %cst_19 = arith.constant 0.000000e+00 : f32
    %31 = vector.broadcast %cst_19 : f32 to vector<16x128xf32>
    %32 = arith.cmpf ogt, %30, %31 : vector<16x128xf32>
    %cst_20 = arith.constant 0.00999999977 : f32
    %33 = vector.broadcast %cst_20 : f32 to vector<16x128xf32>
    %34 = arith.mulf %33, %30 : vector<16x128xf32>
    %35 = arith.select %32, %30, %34 : vector<16x128xi1>, vector<16x128xf32>
    %36 = arith.truncf %35 : vector<16x128xf32> to vector<16x128xbf16>
    %c0_21 = arith.constant 0 : index
    %c0_22 = arith.constant 0 : index
    %37 = vector.load %arg4[%c0_21, %c0_22] : memref<128x128xbf16, #tpu.memory_space<vmem>>, vector<128x128xbf16>
    %cst_23 = arith.constant dense<0.000000e+00> : vector<16x128xf32>
    %38 = tpu.matmul %36, %37, %cst_23 {dimension_numbers = #tpu.dot_dimension_numbers<[1], [0], [0], [1], [0, 0, 1, 1], [], []>} : vector<16x128xbf16>, vector<128x128xbf16>, vector<16x128xf32> -> vector<16x128xf32>
    %c3 = arith.constant 3 : index
    %c0_24 = arith.constant 0 : index
    %39 = vector.load %arg5[%c3, %c0_24] : memref<4x128xf32, #tpu.memory_space<vmem>>, vector<1x128xf32>
    %40 = vector.broadcast %39 : vector<1x128xf32> to vector<16x128xf32>
    %41 = arith.addf %38, %40 : vector<16x128xf32>
    %42 = tpu.iota {dimensions = array<i32: 1>} : vector<16x128xi32>
    %c1_i32 = arith.constant 1 : i32
    %43 = vector.broadcast %c1_i32 : i32 to vector<16x128xi32>
    %44 = arith.cmpi sge, %42, %43 : vector<16x128xi32>
    %c4_i32 = arith.constant 4 : i32
    %45 = vector.broadcast %c4_i32 : i32 to vector<16x128xi32>
    %46 = arith.cmpi sle, %42, %45 : vector<16x128xi32>
    %47 = arith.andi %44, %46 : vector<16x128xi1>
    %cst_25 = arith.constant 0xFF800000 : f32
    %48 = vector.broadcast %cst_25 : f32 to vector<16x128xf32>
    %49 = arith.select %47, %41, %48 : vector<16x128xi1>, vector<16x128xf32>
    %cst_26 = arith.constant dense<0xFF800000> : vector<16xf32>
    %50 = vector.multi_reduction <maximumf>, %49, %cst_26 [1] : vector<16x128xf32> to vector<16xf32>
    %51 = vector.shape_cast %50 : vector<16xf32> to vector<16x1xf32>
    %52 = vector.broadcast %51 : vector<16x1xf32> to vector<16x128xf32>
    %53 = arith.subf %49, %52 : vector<16x128xf32>
    %54 = math.exp %53 : vector<16x128xf32>
    %cst_27 = arith.constant dense<0.000000e+00> : vector<16xf32>
    %55 = vector.multi_reduction <add>, %54, %cst_27 [1] : vector<16x128xf32> to vector<16xf32>
    %56 = vector.shape_cast %55 : vector<16xf32> to vector<16x1xf32>
    %57 = tpu.reciprocal %56 {approx = true} : vector<16x1xf32> -> vector<16x1xf32>
    %58 = vector.broadcast %57 : vector<16x1xf32> to vector<16x128xf32>
    %59 = arith.mulf %54, %58 : vector<16x128xf32>
    %c0_i32 = arith.constant 0 : i32
    %60 = vector.broadcast %c0_i32 : i32 to vector<16x128xi32>
    %61 = arith.cmpi eq, %42, %60 : vector<16x128xi32>
    %62 = arith.select %61, %41, %59 : vector<16x128xi1>, vector<16x128xf32>
    %63 = arith.truncf %62 : vector<16x128xf32> to vector<16x128xbf16>
    %c0_28 = arith.constant 0 : index
    %c0_29 = arith.constant 0 : index
    %64 = vector.load %arg6[%c0_28, %c0_29] : memref<16x128xbf16, #tpu.memory_space<vmem>>, vector<16x128xbf16>
    tpu.vector_store %arg6[%c0_28, %c0_29], %63 {strides = array<i32>} : memref<16x128xbf16, #tpu.memory_space<vmem>>, vector<16x128xbf16>,
    return
  }
  func.func @transform_0(%arg0: i32) -> (i32, i32) {
    %c0_i32 = arith.constant 0 : i32
    %c0_i32_0 = arith.constant 0 : i32
    return %arg0, %c0_i32 : i32, i32
  }
  func.func @transform_1(%arg0: i32) -> (i32, i32) {
    %c0_i32 = arith.constant 0 : i32
    %c0_i32_0 = arith.constant 0 : i32
    %c0_i32_1 = arith.constant 0 : i32
    return %c0_i32, %c0_i32_0 : i32, i32
  }
  func.func @transform_2(%arg0: i32) -> (i32, i32, i32) {
    %c0_i32 = arith.constant 0 : i32
    %c0_i32_0 = arith.constant 0 : i32
    %c0_i32_1 = arith.constant 0 : i32
    %c0_i32_2 = arith.constant 0 : i32
    return %c0_i32, %c0_i32_0, %c0_i32_1 : i32, i32, i32
  }
  func.func @transform_3(%arg0: i32) -> (i32, i32) {
    %c0_i32 = arith.constant 0 : i32
    %c0_i32_0 = arith.constant 0 : i32
    %c0_i32_1 = arith.constant 0 : i32
    return %c0_i32, %c0_i32_0 : i32, i32
  }
  func.func @transform_4(%arg0: i32) -> (i32, i32) {
    %c0_i32 = arith.constant 0 : i32
    %c0_i32_0 = arith.constant 0 : i32
    %c0_i32_1 = arith.constant 0 : i32
    return %c0_i32, %c0_i32_0 : i32, i32
  }
  func.func @transform_5(%arg0: i32) -> (i32, i32) {
    %c0_i32 = arith.constant 0 : i32
    %c0_i32_0 = arith.constant 0 : i32
    return %arg0, %c0_i32 : i32, i32
  }
}

</mosaic_0001>

<llo_original>
// kernel: tpu_custom_call.1
$region0: #{tpu_custom_call.1}
  #allocation0 [shape = 'u32[]', space=smem, size = 0x4, offset = 0x4, fixed_abs, tag = 'smem constant byte address 0x4 - core index']
  #allocation1 [shape = 'u32[144,128]{1,0:T(1,128)}', space=vmem, size = 0x12000, scoped, tag = 'internal scratch']
  %s0 = inlined_call_operand.vmem [shape: f32[16,8], index: 0, kind: input, shape index: {}]
  %s1 = inlined_call_operand.vmem [shape: bf16[8,128], index: 1, kind: input, shape index: {}]
  %s2 = inlined_call_operand.hbm [shape: bf16[2,128,128], index: 2, kind: input, shape index: {}]
  %s3 = inlined_call_operand.hbm [shape: bf16[128,128], index: 3, kind: input, shape index: {}]
  %s4 = inlined_call_operand.vmem [shape: f32[4,128], index: 4, kind: input, shape index: {}]
  %s5 = inlined_call_operand.hbm [shape: bf16[16,128], index: 5, kind: output, shape index: {}]
  %s6 = sld [smem:[#allocation0]]
  $region38: #{tpu_custom_call.1} parent=0
    _
  %s8 = ssub.s32 1, %s6
  %s9 = scalar_select 0, %s8, %s6
  $region1: #{tpu_custom_call.1} parent=0
    #allocation2 [shape = 'u8[65536]{0}', space=vmem, size = 0x10000, scoped, tag = 'input window, operand 2, single buffered']
    #allocation3 [shape = 's32[1]{0}', space=sflag, size = 0x4, scoped, tag = 'scoped memory for tpu_custom_call.1']
    #allocation4 [shape = 's32[1]{0}', space=sflag, size = 0x4, scoped, tag = 'scoped memory for tpu_custom_call.1']
    #allocation5 [shape = 'u8[32768]{0}', space=vmem, size = 0x8000, scoped, tag = 'input window, operand 3, single buffered']
    #allocation6 [shape = 's32[1]{0}', space=sflag, size = 0x4, scoped, tag = 'scoped memory for tpu_custom_call.1']
    #allocation7 [shape = 'u8[4096]{0}', space=vmem, size = 0x1000, scoped, tag = 'output window, operand 0, single buffered']
    %10 = vsyncpa [#allocation3], 0
    %11 = vsyncpa [#allocation6], 0
    %12 = vsyncpa [#allocation4], 0
    // Predicated region
    $region2: #{tpu_custom_call.1} parent=1 // pred_check
      _
    $region3: #{tpu_custom_call.1} parent=1 // pred_check_branch
      %14 = sbr.rel (0) target = $region5
    $region4: #{tpu_custom_call.1} parent=1 // pred_region
      _
    $region5: #{tpu_custom_call.1} parent=1 // pred_fallthru
      _
    // Predicated region
    $region6: #{tpu_custom_call.1} parent=1 // pred_check
      _
    $region7: #{tpu_custom_call.1} parent=1 // pred_check_branch
      %16 = sbr.rel (0) target = $region9
    $region8: #{tpu_custom_call.1} parent=1 // pred_region
      _
    $region9: #{tpu_custom_call.1} parent=1 // pred_fallthru
      _
    // Predicated region
    $region10: #{tpu_custom_call.1} parent=1 // pred_check
      _
    $region11: #{tpu_custom_call.1} parent=1 // pred_check_branch
      %18 = sbr.rel (0) target = $region13
    $region12: #{tpu_custom_call.1} parent=1 // pred_region
      %s20 = ssub.s32 2048, 2048
      %21 = vsyncadd [#allocation3], %s20
      %s22 = sshll.u32 [#allocation2], 4
      %s23 = int_to_ptr.vmem [resolvable:$true] %s22
      %28 = dma.hbm_to_vmem [thread:$0]  %s2, 2048, %s23, [#allocation3], 64, 64, 4
    $region13: #{tpu_custom_call.1} parent=1 // pred_fallthru
      _
    // Predicated region
    $region14: #{tpu_custom_call.1} parent=1 // pred_check
      _
    $region15: #{tpu_custom_call.1} parent=1 // pred_check_branch
      %30 = sbr.rel (0) target = $region17
    $region16: #{tpu_custom_call.1} parent=1 // pred_region
      %s32 = ssub.s32 1024, 1024
      %33 = vsyncadd [#allocation6], %s32
      %s34 = sshll.u32 [#allocation5], 4
      %s35 = int_to_ptr.vmem [resolvable:$true] %s34
      %40 = dma.hbm_to_vmem [thread:$0]  %s3, 1024, %s35, [#allocation6], 64, 64, 4
    $region17: #{tpu_custom_call.1} parent=1 // pred_fallthru
      _
    // Predicated region
    $region18: #{tpu_custom_call.1} parent=1 // pred_check
      _
    $region19: #{tpu_custom_call.1} parent=1 // pred_check_branch
      %42 = sbr.rel (0) target = $region21
    $region20: #{tpu_custom_call.1} parent=1 // pred_region
      _
    $region21: #{tpu_custom_call.1} parent=1 // pred_fallthru
      _
    // Predicated region
    $region22: #{tpu_custom_call.1} parent=1 // pred_check
      _
    $region23: #{tpu_custom_call.1} parent=1 // pred_check_branch
      %44 = sbr.rel (0) target = $region25
    $region24: #{tpu_custom_call.1} parent=1 // pred_region
      %45 = dma.done [#allocation3], 2048
    $region25: #{tpu_custom_call.1} parent=1 // pred_fallthru
      _
    // Predicated region
    $region26: #{tpu_custom_call.1} parent=1 // pred_check
      _
    $region27: #{tpu_custom_call.1} parent=1 // pred_check_branch
      %47 = sbr.rel (0) target = $region29
    $region28: #{tpu_custom_call.1} parent=1 // pred_region
      %48 = dma.done [#allocation6], 1024
    $region29: #{tpu_custom_call.1} parent=1 // pred_fallthru
      _
    %v50 = vld [vmem:[%s0] sm:$0xff]
    %v51 = vld [vmem:[%s0 + $0x8] sm:$0xff]
    %v52 = vpack.c.bf16 %v51, %v50
    %v53 = vld [vmem:[%s1] sm:$0xf]
    %v54 = vld [vmem:[%s4] sm:$0x1]
    %v55 = vlaneseq
    %v56 = vshrl.u32 %v55, 7
    %v57 = vsub.s32 0, %v56
    %v58 = vrot.slane %v54, %v57
    %vm59 = vcmask 64512
    %v61 = vsel %vm59, %v52, 0
    %vm63 = vcmask 1043456
    %v65 = vsel %vm63, %v53, 0
    %67 = vmatprep.subr.bf16.mxu0 0
    %68 = vmatpush1.bf16.msra.mxu0 %v65
    %69 = vmatprep.subr.bf16.mxu0 0
    %70 = vmatpush1.bf16.msra.mxu0 0
    %71 = vmatprep.subr.bf16.mxu0 0
    %72 = vmatpush1.bf16.msra.mxu0 0
    %73 = vmatprep.subr.bf16.mxu0 0
    %74 = vmatpush1.bf16.msra.mxu0 0
    %75 = vmatprep.subr.bf16.mxu0 0
    %76 = vmatpush1.bf16.msra.mxu0 0
    %77 = vmatprep.subr.bf16.mxu0 0
    %78 = vmatpush1.bf16.msra.mxu0 0
    %79 = vmatprep.subr.bf16.mxu0 0
    %80 = vmatpush1.bf16.msra.mxu0 0
    %81 = vmatprep.subr.bf16.mxu0 0
    %82 = vmatpush1.bf16.msra.mxu0 0
    %83 = vmatprep.subr.bf16.mxu0 0
    %84 = vmatpush1.bf16.msra.mxu0 0
    %85 = vmatprep.subr.bf16.mxu0 0
    %86 = vmatpush1.bf16.msra.mxu0 0
    %87 = vmatprep.subr.bf16.mxu0 0
    %88 = vmatpush1.bf16.msra.mxu0 0
    %89 = vmatprep.subr.bf16.mxu0 0
    %90 = vmatpush1.bf16.msra.mxu0 0
    %91 = vmatprep.subr.bf16.mxu0 0
    %92 = vmatpush1.bf16.msra.mxu0 0
    %93 = vmatprep.subr.bf16.mxu0 0
    %94 = vmatpush1.bf16.msra.mxu0 0
    %95 = vmatprep.subr.bf16.mxu0 0
    %96 = vmatpush1.bf16.msra.mxu0 0
    %97 = vmatprep.subr.bf16.mxu0 0
    %98 = vmatpush1.bf16.msra.mxu0 0
    %99 = vmatprep.mubr.bf16.mxu0 0
    %100 = vmatmul.mubr.bf16.gmra.mrb[0].mxu0 %v61
    %v101 = vpop.f32.mrb[0].mxu0
    %v102 = vadd.f32 %v58, %v101
    %v103 = vpop.f32.mrb[0].mxu0
    %v104 = vpop.f32.mrb[0].mxu0
    %v105 = vadd.f32 %v58, %v104
    %v106 = vpop.f32.mrb[0].mxu0
    %107 = vdwg.mxu0
    %vm108 = vcmp.gt.f32.partialorder %v102, 0.0
    %vm109 = vcmp.gt.f32.partialorder %v105, 0.0
    %v110 = vmul.f32 %v102, 0.01
    %v111 = vmul.f32 %v105, 0.01
    %v112 = vsel %vm108, %v102, %v110
    %v113 = vsel %vm109, %v105, %v111
    %v114 = vpack.c.bf16 %v113, %v112
    %v115 = vld [vmem:[#allocation2] sm:$0xf]
    %v116 = vld [vmem:[#allocation2 + $0x4] sm:$0xf]
    %v117 = vld [vmem:[#allocation2 + $0x8] sm:$0xf]
    %v118 = vld [vmem:[#allocation2 + $0xc] sm:$0xf]
    %v119 = vld [vmem:[#allocation2 + $0x10] sm:$0xf]
    %v120 = vld [vmem:[#allocation2 + $0x14] sm:$0xf]
    %v121 = vld [vmem:[#allocation2 + $0x18] sm:$0xf]
    %v122 = vld [vmem:[#allocation2 + $0x1c] sm:$0xf]
    %v123 = vld [vmem:[#allocation2 + $0x20] sm:$0xf]
    %v124 = vld [vmem:[#allocation2 + $0x24] sm:$0xf]
    %v125 = vld [vmem:[#allocation2 + $0x28] sm:$0xf]
    %v126 = vld [vmem:[#allocation2 + $0x2c] sm:$0xf]
    %v127 = vld [vmem:[#allocation2 + $0x30] sm:$0xf]
    %v128 = vld [vmem:[#allocation2 + $0x34] sm:$0xf]
    %v129 = vld [vmem:[#allocation2 + $0x38] sm:$0xf]
    %v130 = vld [vmem:[#allocation2 + $0x3c] sm:$0xf]
    %v131 = vld [vmem:[%s4 + $0x1] sm:$0x1]
    %v132 = vlaneseq
    %v133 = vshrl.u32 %v132, 7
    %v134 = vsub.s32 0, %v133
    %v135 = vrot.slane %v131, %v134
    %v152 = vunpack.c.l.b16 %v115
    %v153 = vunpack.c.l.b16 %v116
    %v154 = vunpack.c.l.b16 %v117
    %v155 = vunpack.c.l.b16 %v118
    %v156 = vunpack.c.l.b16 %v119
    %v157 = vunpack.c.l.b16 %v120
    %v158 = vunpack.c.l.b16 %v121
    %v159 = vunpack.c.l.b16 %v122
    %v160 = vunpack.c.l.b16 %v123
    %v161 = vunpack.c.l.b16 %v124
    %v162 = vunpack.c.l.b16 %v125
    %v163 = vunpack.c.l.b16 %v126
    %v164 = vunpack.c.l.b16 %v127
    %v165 = vunpack.c.l.b16 %v128
    %v166 = vunpack.c.l.b16 %v129
    %v167 = vunpack.c.l.b16 %v130
    %v168 = vpack.c.b16 %v153, %v152
    %v169 = vpack.c.b16 %v155, %v154
    %v170 = vpack.c.b16 %v157, %v156
    %v171 = vpack.c.b16 %v159, %v158
    %v172 = vpack.c.b16 %v161, %v160
    %v173 = vpack.c.b16 %v163, %v162
    %v174 = vpack.c.b16 %v165, %v164
    %v175 = vpack.c.b16 %v167, %v166
    %184 = vmatprep.subr.bf16.mxu0 0
    %185 = vmatpush1.bf16.msra.mxu0 %v168
    %186 = vmatprep.subr.bf16.mxu0 0
    %187 = vmatpush1.bf16.msra.mxu0 %v169
    %188 = vmatprep.subr.bf16.mxu0 0
    %189 = vmatpush1.bf16.msra.mxu0 %v170
    %190 = vmatprep.subr.bf16.mxu0 0
    %191 = vmatpush1.bf16.msra.mxu0 %v171
    %192 = vmatprep.subr.bf16.mxu0 0
    %193 = vmatpush1.bf16.msra.mxu0 %v172
    %194 = vmatprep.subr.bf16.mxu0 0
    %195 = vmatpush1.bf16.msra.mxu0 %v173
    %196 = vmatprep.subr.bf16.mxu0 0
    %197 = vmatpush1.bf16.msra.mxu0 %v174
    %198 = vmatprep.subr.bf16.mxu0 0
    %199 = vmatpush1.bf16.msra.mxu0 %v175
    %200 = vmatprep.subr.bf16.mxu0 0
    %201 = vmatpush1.bf16.msra.mxu0 0
    %202 = vmatprep.subr.bf16.mxu0 0
    %203 = vmatpush1.bf16.msra.mxu0 0
    %204 = vmatprep.subr.bf16.mxu0 0
    %205 = vmatpush1.bf16.msra.mxu0 0
    %206 = vmatprep.subr.bf16.mxu0 0
    %207 = vmatpush1.bf16.msra.mxu0 0
    %208 = vmatprep.subr.bf16.mxu0 0
    %209 = vmatpush1.bf16.msra.mxu0 0
    %210 = vmatprep.subr.bf16.mxu0 0
    %211 = vmatpush1.bf16.msra.mxu0 0
    %212 = vmatprep.subr.bf16.mxu0 0
    %213 = vmatpush1.bf16.msra.mxu0 0
    %214 = vmatprep.subr.bf16.mxu0 0
    %215 = vmatpush1.bf16.msra.mxu0 0
    %216 = vmatprep.mubr.bf16.mxu0 0
    %217 = vmatmul.mubr.bf16.gmra.mrb[0].mxu0 %v114
    %v218 = vpop.f32.mrb[0].mxu0
    %v219 = vadd.f32 %v135, %v218
    %v220 = vpop.f32.mrb[0].mxu0
    %v221 = vpop.f32.mrb[0].mxu0
    %v222 = vadd.f32 %v135, %v221
    %v223 = vpop.f32.mrb[0].mxu0
    %224 = vdwg.mxu0
    %vm225 = vcmp.gt.f32.partialorder %v219, 0.0
    %vm226 = vcmp.gt.f32.partialorder %v222, 0.0
    %v227 = vmul.f32 %v219, 0.01
    %v228 = vmul.f32 %v222, 0.01
    %v229 = vsel %vm225, %v219, %v227
    %v230 = vsel %vm226, %v222, %v228
    %v231 = vpack.c.bf16 %v230, %v229
    %s232 = scalar_lea.vmem [#allocation2], 64
    %v233 = vld [vmem:[%s232] sm:$0xf]
    %v234 = vld [vmem:[%s232 + $0x4] sm:$0xf]
    %v235 = vld [vmem:[%s232 + $0x8] sm:$0xf]
    %v236 = vld [vmem:[%s232 + $0xc] sm:$0xf]
    %v237 = vld [vmem:[%s232 + $0x10] sm:$0xf]
    %v238 = vld [vmem:[%s232 + $0x14] sm:$0xf]
    %v239 = vld [vmem:[%s232 + $0x18] sm:$0xf]
    %v240 = vld [vmem:[%s232 + $0x1c] sm:$0xf]
    %v241 = vld [vmem:[%s232 + $0x20] sm:$0xf]
    %v242 = vld [vmem:[%s232 + $0x24] sm:$0xf]
    %v243 = vld [vmem:[%s232 + $0x28] sm:$0xf]
    %v244 = vld [vmem:[%s232 + $0x2c] sm:$0xf]
    %v245 = vld [vmem:[%s232 + $0x30] sm:$0xf]
    %v246 = vld [vmem:[%s232 + $0x34] sm:$0xf]
    %v247 = vld [vmem:[%s232 + $0x38] sm:$0xf]
    %v248 = vld [vmem:[%s232 + $0x3c] sm:$0xf]
    %v249 = vld [vmem:[%s4 + $0x2] sm:$0x1]
    %v250 = vlaneseq
    %v251 = vshrl.u32 %v250, 7
    %v252 = vsub.s32 0, %v251
    %v253 = vrot.slane %v249, %v252
    %v270 = vunpack.c.l.b16 %v233
    %v271 = vunpack.c.l.b16 %v234
    %v272 = vunpack.c.l.b16 %v235
    %v273 = vunpack.c.l.b16 %v236
    %v274 = vunpack.c.l.b16 %v237
    %v275 = vunpack.c.l.b16 %v238
    %v276 = vunpack.c.l.b16 %v239
    %v277 = vunpack.c.l.b16 %v240
    %v278 = vunpack.c.l.b16 %v241
    %v279 = vunpack.c.l.b16 %v242
    %v280 = vunpack.c.l.b16 %v243
    %v281 = vunpack.c.l.b16 %v244
    %v282 = vunpack.c.l.b16 %v245
    %v283 = vunpack.c.l.b16 %v246
    %v284 = vunpack.c.l.b16 %v247
    %v285 = vunpack.c.l.b16 %v248
    %v286 = vpack.c.b16 %v271, %v270
    %v287 = vpack.c.b16 %v273, %v272
    %v288 = vpack.c.b16 %v275, %v274
    %v289 = vpack.c.b16 %v277, %v276
    %v290 = vpack.c.b16 %v279, %v278
    %v291 = vpack.c.b16 %v281, %v280
    %v292 = vpack.c.b16 %v283, %v282
    %v293 = vpack.c.b16 %v285, %v284
    %302 = vmatprep.subr.bf16.mxu0 0
    %303 = vmatpush1.bf16.msra.mxu0 %v286
    %304 = vmatprep.subr.bf16.mxu0 0
    %305 = vmatpush1.bf16.msra.mxu0 %v287
    %306 = vmatprep.subr.bf16.mxu0 0
    %307 = vmatpush1.bf16.msra.mxu0 %v288
    %308 = vmatprep.subr.bf16.mxu0 0
    %309 = vmatpush1.bf16.msra.mxu0 %v289
    %310 = vmatprep.subr.bf16.mxu0 0
    %311 = vmatpush1.bf16.msra.mxu0 %v290
    %312 = vmatprep.subr.bf16.mxu0 0
    %313 = vmatpush1.bf16.msra.mxu0 %v291
    %314 = vmatprep.subr.bf16.mxu0 0
    %315 = vmatpush1.bf16.msra.mxu0 %v292
    %316 = vmatprep.subr.bf16.mxu0 0
    %317 = vmatpush1.bf16.msra.mxu0 %v293
    %318 = vmatprep.subr.bf16.mxu0 0
    %319 = vmatpush1.bf16.msra.mxu0 0
    %320 = vmatprep.subr.bf16.mxu0 0
    %321 = vmatpush1.bf16.msra.mxu0 0
    %322 = vmatprep.subr.bf16.mxu0 0
    %323 = vmatpush1.bf16.msra.mxu0 0
    %324 = vmatprep.subr.bf16.mxu0 0
    %325 = vmatpush1.bf16.msra.mxu0 0
    %326 = vmatprep.subr.bf16.mxu0 0
    %327 = vmatpush1.bf16.msra.mxu0 0
    %328 = vmatprep.subr.bf16.mxu0 0
    %329 = vmatpush1.bf16.msra.mxu0 0
    %330 = vmatprep.subr.bf16.mxu0 0
    %331 = vmatpush1.bf16.msra.mxu0 0
    %332 = vmatprep.subr.bf16.mxu0 0
    %333 = vmatpush1.bf16.msra.mxu0 0
    %334 = vmatprep.mubr.bf16.mxu0 0
    %335 = vmatmul.mubr.bf16.gmra.mrb[0].mxu0 %v231
    %v336 = vpop.f32.mrb[0].mxu0
    %v337 = vadd.f32 %v253, %v336
    %v338 = vpop.f32.mrb[0].mxu0
    %v339 = vpop.f32.mrb[0].mxu0
    %v340 = vadd.f32 %v253, %v339
    %v341 = vpop.f32.mrb[0].mxu0
    %342 = vdwg.mxu0
    %vm343 = vcmp.gt.f32.partialorder %v337, 0.0
    %vm344 = vcmp.gt.f32.partialorder %v340, 0.0
    %v345 = vmul.f32 %v337, 0.01
    %v346 = vmul.f32 %v340, 0.01
    %v347 = vsel %vm343, %v337, %v345
    %v348 = vsel %vm344, %v340, %v346
    %v349 = vpack.c.bf16 %v348, %v347
    %v350 = vld [vmem:[#allocation5] sm:$0xf]
    %v351 = vld [vmem:[#allocation5 + $0x4] sm:$0xf]
    %v352 = vld [vmem:[#allocation5 + $0x8] sm:$0xf]
    %v353 = vld [vmem:[#allocation5 + $0xc] sm:$0xf]
    %v354 = vld [vmem:[#allocation5 + $0x10] sm:$0xf]
    %v355 = vld [vmem:[#allocation5 + $0x14] sm:$0xf]
    %v356 = vld [vmem:[#allocation5 + $0x18] sm:$0xf]
    %v357 = vld [vmem:[#allocation5 + $0x1c] sm:$0xf]
    %v358 = vld [vmem:[#allocation5 + $0x20] sm:$0xf]
    %v359 = vld [vmem:[#allocation5 + $0x24] sm:$0xf]
    %v360 = vld [vmem:[#allocation5 + $0x28] sm:$0xf]
    %v361 = vld [vmem:[#allocation5 + $0x2c] sm:$0xf]
    %v362 = vld [vmem:[#allocation5 + $0x30] sm:$0xf]
    %v363 = vld [vmem:[#allocation5 + $0x34] sm:$0xf]
    %v364 = vld [vmem:[#allocation5 + $0x38] sm:$0xf]
    %v365 = vld [vmem:[#allocation5 + $0x3c] sm:$0xf]
    %v366 = vld [vmem:[%s4 + $0x3] sm:$0x1]
    %v367 = vlaneseq
    %v368 = vshrl.u32 %v367, 7
    %v369 = vsub.s32 0, %v368
    %v370 = vrot.slane %v366, %v369
    %v387 = vunpack.c.l.b16 %v350
    %v388 = vunpack.c.l.b16 %v351
    %v389 = vunpack.c.l.b16 %v352
    %v390 = vunpack.c.l.b16 %v353
    %v391 = vunpack.c.l.b16 %v354
    %v392 = vunpack.c.l.b16 %v355
    %v393 = vunpack.c.l.b16 %v356
    %v394 = vunpack.c.l.b16 %v357
    %v395 = vunpack.c.l.b16 %v358
    %v396 = vunpack.c.l.b16 %v359
    %v397 = vunpack.c.l.b16 %v360
    %v398 = vunpack.c.l.b16 %v361
    %v399 = vunpack.c.l.b16 %v362
    %v400 = vunpack.c.l.b16 %v363
    %v401 = vunpack.c.l.b16 %v364
    %v402 = vunpack.c.l.b16 %v365
    %v403 = vpack.c.b16 %v388, %v387
    %v404 = vpack.c.b16 %v390, %v389
    %v405 = vpack.c.b16 %v392, %v391
    %v406 = vpack.c.b16 %v394, %v393
    %v407 = vpack.c.b16 %v396, %v395
    %v408 = vpack.c.b16 %v398, %v397
    %v409 = vpack.c.b16 %v400, %v399
    %v410 = vpack.c.b16 %v402, %v401
    %419 = vmatprep.subr.bf16.mxu0 0
    %420 = vmatpush1.bf16.msra.mxu0 %v403
    %421 = vmatprep.subr.bf16.mxu0 0
    %422 = vmatpush1.bf16.msra.mxu0 %v404
    %423 = vmatprep.subr.bf16.mxu0 0
    %424 = vmatpush1.bf16.msra.mxu0 %v405
    %425 = vmatprep.subr.bf16.mxu0 0
    %426 = vmatpush1.bf16.msra.mxu0 %v406
    %427 = vmatprep.subr.bf16.mxu0 0
    %428 = vmatpush1.bf16.msra.mxu0 %v407
    %429 = vmatprep.subr.bf16.mxu0 0
    %430 = vmatpush1.bf16.msra.mxu0 %v408
    %431 = vmatprep.subr.bf16.mxu0 0
    %432 = vmatpush1.bf16.msra.mxu0 %v409
    %433 = vmatprep.subr.bf16.mxu0 0
    %434 = vmatpush1.bf16.msra.mxu0 %v410
    %435 = vmatprep.subr.bf16.mxu0 0
    %436 = vmatpush1.bf16.msra.mxu0 0
    %437 = vmatprep.subr.bf16.mxu0 0
    %438 = vmatpush1.bf16.msra.mxu0 0
    %439 = vmatprep.subr.bf16.mxu0 0
    %440 = vmatpush1.bf16.msra.mxu0 0
    %441 = vmatprep.subr.bf16.mxu0 0
    %442 = vmatpush1.bf16.msra.mxu0 0
    %443 = vmatprep.subr.bf16.mxu0 0
    %444 = vmatpush1.bf16.msra.mxu0 0
    %445 = vmatprep.subr.bf16.mxu0 0
    %446 = vmatpush1.bf16.msra.mxu0 0
    %447 = vmatprep.subr.bf16.mxu0 0
    %448 = vmatpush1.bf16.msra.mxu0 0
    %449 = vmatprep.subr.bf16.mxu0 0
    %450 = vmatpush1.bf16.msra.mxu0 0
    %451 = vmatprep.mubr.bf16.mxu0 0
    %452 = vmatmul.mubr.bf16.gmra.mrb[0].mxu0 %v349
    %v453 = vpop.f32.mrb[0].mxu0
    %v454 = vadd.f32 %v370, %v453
    %v455 = vpop.f32.mrb[0].mxu0
    %v456 = vpop.f32.mrb[0].mxu0
    %v457 = vadd.f32 %v370, %v456
    %v458 = vpop.f32.mrb[0].mxu0
    %459 = vdwg.mxu0
    %v460 = vlaneseq
    %v461 = vand.u32 %v460, 127
    %vm462 = vcmp.ge.s32.totalorder %v461, 1
    %vm463 = vcmp.le.s32.totalorder %v461, 4
    %vm464 = vmand %vm462, %vm463
    %v465 = vsel %vm464, %v454, -inf
    %v466 = vsel %vm464, %v457, -inf
    %467 = vmax.xlane.f32.xlu0 %v465
    %v468 = vpop.xlane.xlu0 %467
    %469 = vmax.xlane.f32.xlu0 %v466
    %v470 = vpop.xlane.xlu0 %469
    %v471 = vsub.f32 %v465, %v468
    %v472 = vsub.f32 %v466, %v470
    %v473 = vmul.f32 %v471, 1.442695
    %v474 = vpow.pop %v473
    %v475 = vmul.f32 %v472, 1.442695
    %v476 = vpow.pop %v475
    %477 = vadd.xlane.f32.xlu0 %v474
    %v478 = vpop.xlane.xlu0 %477
    %479 = vadd.xlane.f32.xlu0 %v476
    %v480 = vpop.xlane.xlu0 %479
    %v481 = vrcp.pop %v478
    %v482 = vrcp.pop %v480
    %v483 = vmul.f32 %v474, %v481
    %v484 = vmul.f32 %v476, %v482
    %vm485 = vcmp.eq.s32.totalorder %v461, 0
    %v486 = vsel %vm485, %v454, %v483
    %v487 = vsel %vm485, %v457, %v484
    %v488 = vpack.c.bf16 %v487, %v486
    %v490 = vunpack.c.l.b16 %v488
    %v491 = vunpack.c.h.b16 %v488
    %v492 = vpack.c.b16 %v490, %v490
    %v493 = vpack.c.b16 %v491, %v491
    %496 = vst [vmem:[#allocation7] sm:$0xf] %v492
    %497 = vst [vmem:[#allocation7 + $0x4] sm:$0xf] %v493
    // Predicated region
    $region30: #{tpu_custom_call.1} parent=1 // pred_check
      _
    $region31: #{tpu_custom_call.1} parent=1 // pred_check_branch
      %499 = sbr.rel (0) target = $region33
    $region32: #{tpu_custom_call.1} parent=1 // pred_region
      %s501 = ssub.s32 128, 128
      %502 = vsyncadd [#allocation4], %s501
      %s503 = sshll.u32 [#allocation7], 4
      %s504 = int_to_ptr.vmem [resolvable:$true] %s503
      %509 = dma.vmem_to_hbm [thread:$0]  %s504, 128, %s5, [#allocation4], 64, 64, 4
    $region33: #{tpu_custom_call.1} parent=1 // pred_fallthru
      _
    // Predicated region
    $region34: #{tpu_custom_call.1} parent=1 // pred_check
      _
    $region35: #{tpu_custom_call.1} parent=1 // pred_check_branch
      %511 = sbr.rel (0) target = $region37
    $region36: #{tpu_custom_call.1} parent=1 // pred_region
      %512 = dma.done [#allocation4], 128
    $region37: #{tpu_custom_call.1} parent=1 // pred_fallthru
      _
    %513 = vsyncpa [#allocation3], 1
    %514 = vsyncpa [#allocation6], 1
    %515 = vsyncpa [#allocation4], 1

</llo_original>
